<compile_context>
chip_gen: v5e
topology: v5e:2x2
jax: 0.10.0
libtpu: 0.0.40
codegen_flags: <defaults>
</compile_context>

<pallas_src>
import functools

import jax
import jax.numpy as jnp
from jax import lax
from jax.experimental import pallas as pl
from jax.experimental.pallas import tpu as pltpu


def lstm_fet_kernel(T, B, H,
                    x_ref, wm_ref, wc_ref, wih_ref, whh_ref, b_ref,
                    wom_ref, woc_ref, bo_ref, scores_ref):
    """x_ref:  (T*B, E) time-major embedded inputs
       wm_ref: (B, T)   mention pooling weights (softmax over time, wrapper)
       wc_ref: (B, T)   context pooling weights
       wih_ref:(E, 4H)  whh_ref:(H, 4H)  b_ref:(1, 4H) = b_ih + b_hh
       wom_ref:(H, Lp)  woc_ref:(H, Lp)  bo_ref:(1, Lp)
       scores_ref: (B, Lp) output (label dim padded to 128-multiple)."""

    # Hoisted input projection: one batched MXU matmul for every time step,
    # bias folded in. Removes x@Wih + bias broadcast from the serial chain.
    xproj = jnp.dot(x_ref[...], wih_ref[...],
                    preferred_element_type=jnp.float32) + b_ref[...]   # (T*B,4H)

    whh = whh_ref[...]          # (H, 4H)
    wm = wm_ref[...]            # (B, T)
    wc = wc_ref[...]            # (B, T)

    h = jnp.zeros((B, H), jnp.float32)
    c = jnp.zeros((B, H), jnp.float32)
    m_acc = jnp.zeros((B, H), jnp.float32)   # online pooled mention repr
    c_acc = jnp.zeros((B, H), jnp.float32)   # online pooled context repr

    # T is small and static -> full unroll with static slices.
    # For large T, switch to a partially-unrolled fori_loop / time-chunk grid.
    for t in range(T):
        gates = xproj[t * B:(t + 1) * B, :] + jnp.dot(
            h, whh, preferred_element_type=jnp.float32)        # (B, 4H)

        # Activations on the full 4H-wide vreg (one EUP pass each), then
        # static lane slices for the i/f/g/o spans (PyTorch gate order).
        sg = jax.nn.sigmoid(gates)
        tg = jnp.tanh(gates)
        i_g = sg[:, 0 * H:1 * H]
        f_g = sg[:, 1 * H:2 * H]
        g_g = tg[:, 2 * H:3 * H]
        o_g = sg[:, 3 * H:4 * H]

        c = f_g * c + i_g * g_g
        h = o_g * jnp.tanh(c)

        # Online masked-softmax pooling (weights precomputed in the wrapper);
        # replaces the (T,B,H) scratch + post-loop reduction.
        m_acc = m_acc + wm[:, t:t + 1] * h
        c_acc = c_acc + wc[:, t:t + 1] * h

    scores_ref[...] = (jnp.dot(m_acc, wom_ref[...],
                               preferred_element_type=jnp.float32)
                       + jnp.dot(c_acc, woc_ref[...],
                                 preferred_element_type=jnp.float32)
                       + bo_ref[...])


def init_params(key, vocab, embed_dim, hidden, num_labels):
    ks = jax.random.split(key, 7)
    s = 1.0 / jnp.sqrt(hidden)
    return {
        "embed": jax.random.normal(ks[0], (vocab, embed_dim), jnp.float32) * 0.1,
        "w_ih": jax.random.uniform(ks[1], (4 * hidden, embed_dim), jnp.float32, -s, s),
        "w_hh": jax.random.uniform(ks[2], (4 * hidden, hidden), jnp.float32, -s, s),
        "b_ih": jax.random.uniform(ks[3], (4 * hidden,), jnp.float32, -s, s),
        "b_hh": jax.random.uniform(ks[4], (4 * hidden,), jnp.float32, -s, s),
        "w_out": jax.random.uniform(ks[5], (num_labels, 2 * hidden), jnp.float32, -s, s),
        "b_out": jax.random.uniform(ks[6], (num_labels,), jnp.float32, -s, s),
    }


@jax.jit
def lstm_fet_forward(params, inputs, mention_mask, context_mask, labels):
    # Glue: embedding gather, time-major layout, pooling-weight softmax,
    # weight transposes, label-dim padding, final loss.
    emb = jnp.take(params["embed"], inputs, axis=0)            # (B, T, E)
    B, T, E = emb.shape
    H = params["w_hh"].shape[1]
    L = params["w_out"].shape[0]
    Lp = ((L + 127) // 128) * 128                              # lane-dense labels

    x = jnp.transpose(emb, (1, 0, 2)).reshape(T * B, E).astype(jnp.float32)

    # Masked-softmax pooling weights over time; tiny (B,T) -> cheaper in XLA,
    # and lets the kernel accumulate pooled reprs online.
    wm = jax.nn.softmax((1.0 - mention_mask.astype(jnp.float32)) * -1e14, axis=-1)
    wc = jax.nn.softmax((1.0 - context_mask.astype(jnp.float32)) * -1e14, axis=-1)

    wih_t = params["w_ih"].T                                   # (E, 4H)
    whh_t = params["w_hh"].T                                   # (H, 4H)
    b = (params["b_ih"] + params["b_hh"]).reshape(1, 4 * H)    # (1, 4H)

    w_out_p = jnp.zeros((2 * H, Lp), jnp.float32).at[:, :L].set(params["w_out"].T)
    b_out_p = jnp.zeros((1, Lp), jnp.float32).at[:, :L].set(params["b_out"].reshape(1, L))
    w_out_m = w_out_p[:H]                                      # (H, Lp)
    w_out_c = w_out_p[H:]                                      # (H, Lp)

    vmem = pl.BlockSpec(memory_space=pltpu.MemorySpace.VMEM)

    flops = 2 * T * B * E * 4 * H + 2 * T * B * H * 4 * H + 2 * B * 2 * H * Lp
    transcendentals = 3 * T * B * 4 * H
    bytes_accessed = 4 * (T * B * E + 2 * B * T + E * 4 * H + H * 4 * H + 4 * H
                          + 2 * H * Lp + Lp + B * Lp)

    scores_p = pl.pallas_call(
        functools.partial(lstm_fet_kernel, T, B, H),
        out_shape=jax.ShapeDtypeStruct((B, Lp), jnp.float32),
        in_specs=[vmem] * 9,
        out_specs=vmem,
        compiler_params=pltpu.CompilerParams(vmem_limit_bytes=32 * 1024 * 1024),
        cost_estimate=pl.CostEstimate(flops=flops,
                                      transcendentals=transcendentals,
                                      bytes_accessed=bytes_accessed),
    )(x, wm, wc, wih_t, whh_t, b, w_out_m, w_out_c, b_out_p)
    # TODO(synk): at production sizes, tile x over a (batch-parallel, time)
    # grid with BlockSpec pipelining instead of keeping it fully VMEM-resident.

    scores = scores_p[:, :L]

    # MultiLabelSoftMarginLoss: mean over labels, mean over batch (in wrapper
    # so the kernel tail / outputs stay lane-dense).
    y = labels.astype(jnp.float32)
    per = y * jax.nn.log_sigmoid(scores) + (1.0 - y) * jax.nn.log_sigmoid(-scores)
    loss = -jnp.mean(per)
    return loss, scores


def ref_forward(params, inputs, mention_mask, context_mask, labels):
    # Pure-JAX reference matching the PyTorch forward semantics (same default
    # matmul precision as the kernel).
    emb = jnp.take(params["embed"], inputs, axis=0)            # (B, T, E)
    B, T, E = emb.shape
    H = params["w_hh"].shape[1]
    wih_t, whh_t = params["w_ih"].T, params["w_hh"].T
    b = params["b_ih"] + params["b_hh"]

    def step(carry, x_t):
        h, c = carry
        g = jnp.matmul(x_t, wih_t) + jnp.matmul(h, whh_t) + b
        i = jax.nn.sigmoid(g[:, :H])
        f = jax.nn.sigmoid(g[:, H:2 * H])
        gg = jnp.tanh(g[:, 2 * H:3 * H])
        o = jax.nn.sigmoid(g[:, 3 * H:])
        c = f * c + i * gg
        h = o * jnp.tanh(c)
        return (h, c), h

    init = (jnp.zeros((B, H), jnp.float32), jnp.zeros((B, H), jnp.float32))
    _, hs = lax.scan(step, init, jnp.transpose(emb, (1, 0, 2)))
    lstm_out = jnp.transpose(hs, (1, 0, 2))                    # (B, T, H)

    def pool(mask):
        w = jax.nn.softmax((1.0 - mask.astype(jnp.float32)) * -1e14, axis=-1)
        return jnp.sum(lstm_out * w[..., None], axis=1)

    mention = pool(mention_mask)
    context = pool(context_mask)
    combine = jnp.concatenate([mention, context], axis=1)
    scores = jnp.matmul(combine, params["w_out"].T) + params["b_out"]
    y = labels.astype(jnp.float32)
    per = y * jax.nn.log_sigmoid(scores) + (1.0 - y) * jax.nn.log_sigmoid(-scores)
    return -jnp.mean(per), scores


if __name__ == "__main__":
    B, T, E, H, L, V = 2, 8, 32, 32, 16, 50

    key = jax.random.PRNGKey(0)
    kp, ki, kl = jax.random.split(key, 3)
    params = init_params(kp, V, E, H, L)

    inputs = jax.random.randint(ki, (B, T), 0, V, dtype=jnp.int32)
    seq_lens = jnp.array([8, 6], dtype=jnp.int32)

    # mention mask: seq0 -> token 1, seq1 -> token 2
    mention_mask = jnp.zeros((B, T), jnp.float32)
    mention_mask = mention_mask.at[0, 1].set(1.0).at[1, 2].set(1.0)
    # context mask: 1 for valid tokens
    context_mask = (jnp.arange(T)[None, :] < seq_lens[:, None]).astype(jnp.float32)

    labels = (jax.random.uniform(kl, (B, L)) > 0.5).astype(jnp.float32)

    loss, scores = lstm_fet_forward(params, inputs, mention_mask, context_mask, labels)
    jax.block_until_ready((loss, scores))

    ref_loss, ref_scores = ref_forward(params, inputs, mention_mask, context_mask, labels)
    assert jnp.allclose(scores, ref_scores, atol=2e-3, rtol=2e-3), "scores mismatch"
    assert jnp.allclose(loss, ref_loss, atol=2e-3, rtol=2e-3), "loss mismatch"

    print("KERNEL_OK")
</pallas_src>

<mosaic_0001>
module attributes {stable_mosaic.version = 11 : i64} {
  func.func @lstm_fet_kernel(%arg0: memref<16x32xf32, #tpu.memory_space<vmem>>, %arg1: memref<2x8xf32, #tpu.memory_space<vmem>>, %arg2: memref<2x8xf32, #tpu.memory_space<vmem>>, %arg3: memref<32x128xf32, #tpu.memory_space<vmem>>, %arg4: memref<32x128xf32, #tpu.memory_space<vmem>>, %arg5: memref<1x128xf32, #tpu.memory_space<vmem>>, %arg6: memref<32x128xf32, #tpu.memory_space<vmem>>, %arg7: memref<32x128xf32, #tpu.memory_space<vmem>>, %arg8: memref<1x128xf32, #tpu.memory_space<vmem>>, %arg9: memref<2x128xf32, #tpu.memory_space<vmem>>) attributes {dimension_semantics = [], scalar_prefetch = 0 : i64, scratch_operands = 0 : i64, tpu.core_type = #tpu.core_type<tc>} {
    %c0 = arith.constant 0 : index
    %c0_0 = arith.constant 0 : index
    %0 = vector.load %arg0[%c0, %c0_0] : memref<16x32xf32, #tpu.memory_space<vmem>>, vector<16x32xf32>
    %c0_1 = arith.constant 0 : index
    %c0_2 = arith.constant 0 : index
    %1 = vector.load %arg3[%c0_1, %c0_2] : memref<32x128xf32, #tpu.memory_space<vmem>>, vector<32x128xf32>
    %cst = arith.constant dense<0.000000e+00> : vector<16x128xf32>
    %2 = tpu.matmul %0, %1, %cst {dimension_numbers = #tpu.dot_dimension_numbers<[1], [0], [0], [1], [0, 0, 1, 1], [], []>} : vector<16x32xf32>, vector<32x128xf32>, vector<16x128xf32> -> vector<16x128xf32>
    %c0_3 = arith.constant 0 : index
    %c0_4 = arith.constant 0 : index
    %3 = vector.load %arg5[%c0_3, %c0_4] : memref<1x128xf32, #tpu.memory_space<vmem>>, vector<1x128xf32>
    %4 = vector.broadcast %3 : vector<1x128xf32> to vector<16x128xf32>
    %5 = arith.addf %2, %4 : vector<16x128xf32>
    %c0_5 = arith.constant 0 : index
    %c0_6 = arith.constant 0 : index
    %6 = vector.load %arg4[%c0_5, %c0_6] : memref<32x128xf32, #tpu.memory_space<vmem>>, vector<32x128xf32>
    %c0_7 = arith.constant 0 : index
    %c0_8 = arith.constant 0 : index
    %7 = vector.load %arg1[%c0_7, %c0_8] : memref<2x8xf32, #tpu.memory_space<vmem>>, vector<2x8xf32>
    %c0_9 = arith.constant 0 : index
    %c0_10 = arith.constant 0 : index
    %8 = vector.load %arg2[%c0_9, %c0_10] : memref<2x8xf32, #tpu.memory_space<vmem>>, vector<2x8xf32>
    %cst_11 = arith.constant 0.000000e+00 : f32
    %9 = vector.broadcast %cst_11 : f32 to vector<2x32xf32>
    %cst_12 = arith.constant 0.000000e+00 : f32
    %10 = vector.broadcast %cst_12 : f32 to vector<2x32xf32>
    %cst_13 = arith.constant 0.000000e+00 : f32
    %11 = vector.broadcast %cst_13 : f32 to vector<2x32xf32>
    %cst_14 = arith.constant 0.000000e+00 : f32
    %12 = vector.broadcast %cst_14 : f32 to vector<2x32xf32>
    %13 = vector.extract_strided_slice %5 {offsets = [0, 0], sizes = [2, 128], strides = [1, 1]} : vector<16x128xf32> to vector<2x128xf32>
    %cst_15 = arith.constant dense<0.000000e+00> : vector<2x128xf32>
    %14 = tpu.matmul %9, %6, %cst_15 {dimension_numbers = #tpu.dot_dimension_numbers<[1], [0], [0], [1], [0, 0, 1, 1], [], []>} : vector<2x32xf32>, vector<32x128xf32>, vector<2x128xf32> -> vector<2x128xf32>
    %15 = arith.addf %13, %14 : vector<2x128xf32>
    %16 = arith.negf %15 : vector<2x128xf32>
    %17 = math.exp %16 : vector<2x128xf32>
    %cst_16 = arith.constant 1.000000e+00 : f32
    %18 = vector.broadcast %cst_16 : f32 to vector<2x128xf32>
    %19 = arith.addf %18, %17 : vector<2x128xf32>
    %20 = arith.divf %18, %19 : vector<2x128xf32>
    %21 = math.tanh %15 : vector<2x128xf32>
    %22 = vector.extract_strided_slice %20 {offsets = [0, 0], sizes = [2, 32], strides = [1, 1]} : vector<2x128xf32> to vector<2x32xf32>
    %23 = vector.extract_strided_slice %20 {offsets = [0, 32], sizes = [2, 32], strides = [1, 1]} : vector<2x128xf32> to vector<2x32xf32>
    %24 = vector.extract_strided_slice %21 {offsets = [0, 64], sizes = [2, 32], strides = [1, 1]} : vector<2x128xf32> to vector<2x32xf32>
    %25 = vector.extract_strided_slice %20 {offsets = [0, 96], sizes = [2, 32], strides = [1, 1]} : vector<2x128xf32> to vector<2x32xf32>
    %26 = arith.mulf %23, %10 : vector<2x32xf32>
    %27 = arith.mulf %22, %24 : vector<2x32xf32>
    %28 = arith.addf %26, %27 : vector<2x32xf32>
    %29 = math.tanh %28 : vector<2x32xf32>
    %30 = arith.mulf %25, %29 : vector<2x32xf32>
    %31 = vector.extract_strided_slice %7 {offsets = [0, 0], sizes = [2, 1], strides = [1, 1]} : vector<2x8xf32> to vector<2x1xf32>
    %32 = vector.broadcast %31 : vector<2x1xf32> to vector<2x32xf32>
    %33 = arith.mulf %32, %30 : vector<2x32xf32>
    %34 = arith.addf %11, %33 : vector<2x32xf32>
    %35 = vector.extract_strided_slice %8 {offsets = [0, 0], sizes = [2, 1], strides = [1, 1]} : vector<2x8xf32> to vector<2x1xf32>
    %36 = vector.broadcast %35 : vector<2x1xf32> to vector<2x32xf32>
    %37 = arith.mulf %36, %30 : vector<2x32xf32>
    %38 = arith.addf %12, %37 : vector<2x32xf32>
    %39 = vector.extract_strided_slice %5 {offsets = [2, 0], sizes = [2, 128], strides = [1, 1]} : vector<16x128xf32> to vector<2x128xf32>
    %cst_17 = arith.constant dense<0.000000e+00> : vector<2x128xf32>
    %40 = tpu.matmul %30, %6, %cst_17 {dimension_numbers = #tpu.dot_dimension_numbers<[1], [0], [0], [1], [0, 0, 1, 1], [], []>} : vector<2x32xf32>, vector<32x128xf32>, vector<2x128xf32> -> vector<2x128xf32>
    %41 = arith.addf %39, %40 : vector<2x128xf32>
    %42 = arith.negf %41 : vector<2x128xf32>
    %43 = math.exp %42 : vector<2x128xf32>
    %cst_18 = arith.constant 1.000000e+00 : f32
    %44 = vector.broadcast %cst_18 : f32 to vector<2x128xf32>
    %45 = arith.addf %44, %43 : vector<2x128xf32>
    %46 = arith.divf %44, %45 : vector<2x128xf32>
    %47 = math.tanh %41 : vector<2x128xf32>
    %48 = vector.extract_strided_slice %46 {offsets = [0, 0], sizes = [2, 32], strides = [1, 1]} : vector<2x128xf32> to vector<2x32xf32>
    %49 = vector.extract_strided_slice %46 {offsets = [0, 32], sizes = [2, 32], strides = [1, 1]} : vector<2x128xf32> to vector<2x32xf32>
    %50 = vector.extract_strided_slice %47 {offsets = [0, 64], sizes = [2, 32], strides = [1, 1]} : vector<2x128xf32> to vector<2x32xf32>
    %51 = vector.extract_strided_slice %46 {offsets = [0, 96], sizes = [2, 32], strides = [1, 1]} : vector<2x128xf32> to vector<2x32xf32>
    %52 = arith.mulf %49, %28 : vector<2x32xf32>
    %53 = arith.mulf %48, %50 : vector<2x32xf32>
    %54 = arith.addf %52, %53 : vector<2x32xf32>
    %55 = math.tanh %54 : vector<2x32xf32>
    %56 = arith.mulf %51, %55 : vector<2x32xf32>
    %57 = vector.extract_strided_slice %7 {offsets = [0, 1], sizes = [2, 1], strides = [1, 1]} : vector<2x8xf32> to vector<2x1xf32>
    %58 = vector.broadcast %57 : vector<2x1xf32> to vector<2x32xf32>
    %59 = arith.mulf %58, %56 : vector<2x32xf32>
    %60 = arith.addf %34, %59 : vector<2x32xf32>
    %61 = vector.extract_strided_slice %8 {offsets = [0, 1], sizes = [2, 1], strides = [1, 1]} : vector<2x8xf32> to vector<2x1xf32>
    %62 = vector.broadcast %61 : vector<2x1xf32> to vector<2x32xf32>
    %63 = arith.mulf %62, %56 : vector<2x32xf32>
    %64 = arith.addf %38, %63 : vector<2x32xf32>
    %65 = vector.extract_strided_slice %5 {offsets = [4, 0], sizes = [2, 128], strides = [1, 1]} : vector<16x128xf32> to vector<2x128xf32>
    %cst_19 = arith.constant dense<0.000000e+00> : vector<2x128xf32>
    %66 = tpu.matmul %56, %6, %cst_19 {dimension_numbers = #tpu.dot_dimension_numbers<[1], [0], [0], [1], [0, 0, 1, 1], [], []>} : vector<2x32xf32>, vector<32x128xf32>, vector<2x128xf32> -> vector<2x128xf32>
    %67 = arith.addf %65, %66 : vector<2x128xf32>
    %68 = arith.negf %67 : vector<2x128xf32>
    %69 = math.exp %68 : vector<2x128xf32>
    %cst_20 = arith.constant 1.000000e+00 : f32
    %70 = vector.broadcast %cst_20 : f32 to vector<2x128xf32>
    %71 = arith.addf %70, %69 : vector<2x128xf32>
    %72 = arith.divf %70, %71 : vector<2x128xf32>
    %73 = math.tanh %67 : vector<2x128xf32>
    %74 = vector.extract_strided_slice %72 {offsets = [0, 0], sizes = [2, 32], strides = [1, 1]} : vector<2x128xf32> to vector<2x32xf32>
    %75 = vector.extract_strided_slice %72 {offsets = [0, 32], sizes = [2, 32], strides = [1, 1]} : vector<2x128xf32> to vector<2x32xf32>
    %76 = vector.extract_strided_slice %73 {offsets = [0, 64], sizes = [2, 32], strides = [1, 1]} : vector<2x128xf32> to vector<2x32xf32>
    %77 = vector.extract_strided_slice %72 {offsets = [0, 96], sizes = [2, 32], strides = [1, 1]} : vector<2x128xf32> to vector<2x32xf32>
    %78 = arith.mulf %75, %54 : vector<2x32xf32>
    %79 = arith.mulf %74, %76 : vector<2x32xf32>
    %80 = arith.addf %78, %79 : vector<2x32xf32>
    %81 = math.tanh %80 : vector<2x32xf32>
    %82 = arith.mulf %77, %81 : vector<2x32xf32>
    %83 = vector.extract_strided_slice %7 {offsets = [0, 2], sizes = [2, 1], strides = [1, 1]} : vector<2x8xf32> to vector<2x1xf32>
    %84 = vector.broadcast %83 : vector<2x1xf32> to vector<2x32xf32>
    %85 = arith.mulf %84, %82 : vector<2x32xf32>
    %86 = arith.addf %60, %85 : vector<2x32xf32>
    %87 = vector.extract_strided_slice %8 {offsets = [0, 2], sizes = [2, 1], strides = [1, 1]} : vector<2x8xf32> to vector<2x1xf32>
    %88 = vector.broadcast %87 : vector<2x1xf32> to vector<2x32xf32>
    %89 = arith.mulf %88, %82 : vector<2x32xf32>
    %90 = arith.addf %64, %89 : vector<2x32xf32>
    %91 = vector.extract_strided_slice %5 {offsets = [6, 0], sizes = [2, 128], strides = [1, 1]} : vector<16x128xf32> to vector<2x128xf32>
    %cst_21 = arith.constant dense<0.000000e+00> : vector<2x128xf32>
    %92 = tpu.matmul %82, %6, %cst_21 {dimension_numbers = #tpu.dot_dimension_numbers<[1], [0], [0], [1], [0, 0, 1, 1], [], []>} : vector<2x32xf32>, vector<32x128xf32>, vector<2x128xf32> -> vector<2x128xf32>
    %93 = arith.addf %91, %92 : vector<2x128xf32>
    %94 = arith.negf %93 : vector<2x128xf32>
    %95 = math.exp %94 : vector<2x128xf32>
    %cst_22 = arith.constant 1.000000e+00 : f32
    %96 = vector.broadcast %cst_22 : f32 to vector<2x128xf32>
    %97 = arith.addf %96, %95 : vector<2x128xf32>
    %98 = arith.divf %96, %97 : vector<2x128xf32>
    %99 = math.tanh %93 : vector<2x128xf32>
    %100 = vector.extract_strided_slice %98 {offsets = [0, 0], sizes = [2, 32], strides = [1, 1]} : vector<2x128xf32> to vector<2x32xf32>
    %101 = vector.extract_strided_slice %98 {offsets = [0, 32], sizes = [2, 32], strides = [1, 1]} : vector<2x128xf32> to vector<2x32xf32>
    %102 = vector.extract_strided_slice %99 {offsets = [0, 64], sizes = [2, 32], strides = [1, 1]} : vector<2x128xf32> to vector<2x32xf32>
    %103 = vector.extract_strided_slice %98 {offsets = [0, 96], sizes = [2, 32], strides = [1, 1]} : vector<2x128xf32> to vector<2x32xf32>
    %104 = arith.mulf %101, %80 : vector<2x32xf32>
    %105 = arith.mulf %100, %102 : vector<2x32xf32>
    %106 = arith.addf %104, %105 : vector<2x32xf32>
    %107 = math.tanh %106 : vector<2x32xf32>
    %108 = arith.mulf %103, %107 : vector<2x32xf32>
    %109 = vector.extract_strided_slice %7 {offsets = [0, 3], sizes = [2, 1], strides = [1, 1]} : vector<2x8xf32> to vector<2x1xf32>
    %110 = vector.broadcast %109 : vector<2x1xf32> to vector<2x32xf32>
    %111 = arith.mulf %110, %108 : vector<2x32xf32>
    %112 = arith.addf %86, %111 : vector<2x32xf32>
    %113 = vector.extract_strided_slice %8 {offsets = [0, 3], sizes = [2, 1], strides = [1, 1]} : vector<2x8xf32> to vector<2x1xf32>
    %114 = vector.broadcast %113 : vector<2x1xf32> to vector<2x32xf32>
    %115 = arith.mulf %114, %108 : vector<2x32xf32>
    %116 = arith.addf %90, %115 : vector<2x32xf32>
    %117 = vector.extract_strided_slice %5 {offsets = [8, 0], sizes = [2, 128], strides = [1, 1]} : vector<16x128xf32> to vector<2x128xf32>
    %cst_23 = arith.constant dense<0.000000e+00> : vector<2x128xf32>
    %118 = tpu.matmul %108, %6, %cst_23 {dimension_numbers = #tpu.dot_dimension_numbers<[1], [0], [0], [1], [0, 0, 1, 1], [], []>} : vector<2x32xf32>, vector<32x128xf32>, vector<2x128xf32> -> vector<2x128xf32>
    %119 = arith.addf %117, %118 : vector<2x128xf32>
    %120 = arith.negf %119 : vector<2x128xf32>
    %121 = math.exp %120 : vector<2x128xf32>
    %cst_24 = arith.constant 1.000000e+00 : f32
    %122 = vector.broadcast %cst_24 : f32 to vector<2x128xf32>
    %123 = arith.addf %122, %121 : vector<2x128xf32>
    %124 = arith.divf %122, %123 : vector<2x128xf32>
    %125 = math.tanh %119 : vector<2x128xf32>
    %126 = vector.extract_strided_slice %124 {offsets = [0, 0], sizes = [2, 32], strides = [1, 1]} : vector<2x128xf32> to vector<2x32xf32>
    %127 = vector.extract_strided_slice %124 {offsets = [0, 32], sizes = [2, 32], strides = [1, 1]} : vector<2x128xf32> to vector<2x32xf32>
    %128 = vector.extract_strided_slice %125 {offsets = [0, 64], sizes = [2, 32], strides = [1, 1]} : vector<2x128xf32> to vector<2x32xf32>
    %129 = vector.extract_strided_slice %124 {offsets = [0, 96], sizes = [2, 32], strides = [1, 1]} : vector<2x128xf32> to vector<2x32xf32>
    %130 = arith.mulf %127, %106 : vector<2x32xf32>
    %131 = arith.mulf %126, %128 : vector<2x32xf32>
    %132 = arith.addf %130, %131 : vector<2x32xf32>
    %133 = math.tanh %132 : vector<2x32xf32>
    %134 = arith.mulf %129, %133 : vector<2x32xf32>
    %135 = vector.extract_strided_slice %7 {offsets = [0, 4], sizes = [2, 1], strides = [1, 1]} : vector<2x8xf32> to vector<2x1xf32>
    %136 = vector.broadcast %135 : vector<2x1xf32> to vector<2x32xf32>
    %137 = arith.mulf %136, %134 : vector<2x32xf32>
    %138 = arith.addf %112, %137 : vector<2x32xf32>
    %139 = vector.extract_strided_slice %8 {offsets = [0, 4], sizes = [2, 1], strides = [1, 1]} : vector<2x8xf32> to vector<2x1xf32>
    %140 = vector.broadcast %139 : vector<2x1xf32> to vector<2x32xf32>
    %141 = arith.mulf %140, %134 : vector<2x32xf32>
    %142 = arith.addf %116, %141 : vector<2x32xf32>
    %143 = vector.extract_strided_slice %5 {offsets = [10, 0], sizes = [2, 128], strides = [1, 1]} : vector<16x128xf32> to vector<2x128xf32>
    %cst_25 = arith.constant dense<0.000000e+00> : vector<2x128xf32>
    %144 = tpu.matmul %134, %6, %cst_25 {dimension_numbers = #tpu.dot_dimension_numbers<[1], [0], [0], [1], [0, 0, 1, 1], [], []>} : vector<2x32xf32>, vector<32x128xf32>, vector<2x128xf32> -> vector<2x128xf32>
    %145 = arith.addf %143, %144 : vector<2x128xf32>
    %146 = arith.negf %145 : vector<2x128xf32>
    %147 = math.exp %146 : vector<2x128xf32>
    %cst_26 = arith.constant 1.000000e+00 : f32
    %148 = vector.broadcast %cst_26 : f32 to vector<2x128xf32>
    %149 = arith.addf %148, %147 : vector<2x128xf32>
    %150 = arith.divf %148, %149 : vector<2x128xf32>
    %151 = math.tanh %145 : vector<2x128xf32>
    %152 = vector.extract_strided_slice %150 {offsets = [0, 0], sizes = [2, 32], strides = [1, 1]} : vector<2x128xf32> to vector<2x32xf32>
    %153 = vector.extract_strided_slice %150 {offsets = [0, 32], sizes = [2, 32], strides = [1, 1]} : vector<2x128xf32> to vector<2x32xf32>
    %154 = vector.extract_strided_slice %151 {offsets = [0, 64], sizes = [2, 32], strides = [1, 1]} : vector<2x128xf32> to vector<2x32xf32>
    %155 = vector.extract_strided_slice %150 {offsets = [0, 96], sizes = [2, 32], strides = [1, 1]} : vector<2x128xf32> to vector<2x32xf32>
    %156 = arith.mulf %153, %132 : vector<2x32xf32>
    %157 = arith.mulf %152, %154 : vector<2x32xf32>
    %158 = arith.addf %156, %157 : vector<2x32xf32>
    %159 = math.tanh %158 : vector<2x32xf32>
    %160 = arith.mulf %155, %159 : vector<2x32xf32>
    %161 = vector.extract_strided_slice %7 {offsets = [0, 5], sizes = [2, 1], strides = [1, 1]} : vector<2x8xf32> to vector<2x1xf32>
    %162 = vector.broadcast %161 : vector<2x1xf32> to vector<2x32xf32>
    %163 = arith.mulf %162, %160 : vector<2x32xf32>
    %164 = arith.addf %138, %163 : vector<2x32xf32>
    %165 = vector.extract_strided_slice %8 {offsets = [0, 5], sizes = [2, 1], strides = [1, 1]} : vector<2x8xf32> to vector<2x1xf32>
    %166 = vector.broadcast %165 : vector<2x1xf32> to vector<2x32xf32>
    %167 = arith.mulf %166, %160 : vector<2x32xf32>
    %168 = arith.addf %142, %167 : vector<2x32xf32>
    %169 = vector.extract_strided_slice %5 {offsets = [12, 0], sizes = [2, 128], strides = [1, 1]} : vector<16x128xf32> to vector<2x128xf32>
    %cst_27 = arith.constant dense<0.000000e+00> : vector<2x128xf32>
    %170 = tpu.matmul %160, %6, %cst_27 {dimension_numbers = #tpu.dot_dimension_numbers<[1], [0], [0], [1], [0, 0, 1, 1], [], []>} : vector<2x32xf32>, vector<32x128xf32>, vector<2x128xf32> -> vector<2x128xf32>
    %171 = arith.addf %169, %170 : vector<2x128xf32>
    %172 = arith.negf %171 : vector<2x128xf32>
    %173 = math.exp %172 : vector<2x128xf32>
    %cst_28 = arith.constant 1.000000e+00 : f32
    %174 = vector.broadcast %cst_28 : f32 to vector<2x128xf32>
    %175 = arith.addf %174, %173 : vector<2x128xf32>
    %176 = arith.divf %174, %175 : vector<2x128xf32>
    %177 = math.tanh %171 : vector<2x128xf32>
    %178 = vector.extract_strided_slice %176 {offsets = [0, 0], sizes = [2, 32], strides = [1, 1]} : vector<2x128xf32> to vector<2x32xf32>
    %179 = vector.extract_strided_slice %176 {offsets = [0, 32], sizes = [2, 32], strides = [1, 1]} : vector<2x128xf32> to vector<2x32xf32>
    %180 = vector.extract_strided_slice %177 {offsets = [0, 64], sizes = [2, 32], strides = [1, 1]} : vector<2x128xf32> to vector<2x32xf32>
    %181 = vector.extract_strided_slice %176 {offsets = [0, 96], sizes = [2, 32], strides = [1, 1]} : vector<2x128xf32> to vector<2x32xf32>
    %182 = arith.mulf %179, %158 : vector<2x32xf32>
    %183 = arith.mulf %178, %180 : vector<2x32xf32>
    %184 = arith.addf %182, %183 : vector<2x32xf32>
    %185 = math.tanh %184 : vector<2x32xf32>
    %186 = arith.mulf %181, %185 : vector<2x32xf32>
    %187 = vector.extract_strided_slice %7 {offsets = [0, 6], sizes = [2, 1], strides = [1, 1]} : vector<2x8xf32> to vector<2x1xf32>
    %188 = vector.broadcast %187 : vector<2x1xf32> to vector<2x32xf32>
    %189 = arith.mulf %188, %186 : vector<2x32xf32>
    %190 = arith.addf %164, %189 : vector<2x32xf32>
    %191 = vector.extract_strided_slice %8 {offsets = [0, 6], sizes = [2, 1], strides = [1, 1]} : vector<2x8xf32> to vector<2x1xf32>
    %192 = vector.broadcast %191 : vector<2x1xf32> to vector<2x32xf32>
    %193 = arith.mulf %192, %186 : vector<2x32xf32>
    %194 = arith.addf %168, %193 : vector<2x32xf32>
    %195 = vector.extract_strided_slice %5 {offsets = [14, 0], sizes = [2, 128], strides = [1, 1]} : vector<16x128xf32> to vector<2x128xf32>
    %cst_29 = arith.constant dense<0.000000e+00> : vector<2x128xf32>
    %196 = tpu.matmul %186, %6, %cst_29 {dimension_numbers = #tpu.dot_dimension_numbers<[1], [0], [0], [1], [0, 0, 1, 1], [], []>} : vector<2x32xf32>, vector<32x128xf32>, vector<2x128xf32> -> vector<2x128xf32>
    %197 = arith.addf %195, %196 : vector<2x128xf32>
    %198 = arith.negf %197 : vector<2x128xf32>
    %199 = math.exp %198 : vector<2x128xf32>
    %cst_30 = arith.constant 1.000000e+00 : f32
    %200 = vector.broadcast %cst_30 : f32 to vector<2x128xf32>
    %201 = arith.addf %200, %199 : vector<2x128xf32>
    %202 = arith.divf %200, %201 : vector<2x128xf32>
    %203 = math.tanh %197 : vector<2x128xf32>
    %204 = vector.extract_strided_slice %202 {offsets = [0, 0], sizes = [2, 32], strides = [1, 1]} : vector<2x128xf32> to vector<2x32xf32>
    %205 = vector.extract_strided_slice %202 {offsets = [0, 32], sizes = [2, 32], strides = [1, 1]} : vector<2x128xf32> to vector<2x32xf32>
    %206 = vector.extract_strided_slice %203 {offsets = [0, 64], sizes = [2, 32], strides = [1, 1]} : vector<2x128xf32> to vector<2x32xf32>
    %207 = vector.extract_strided_slice %202 {offsets = [0, 96], sizes = [2, 32], strides = [1, 1]} : vector<2x128xf32> to vector<2x32xf32>
    %208 = arith.mulf %205, %184 : vector<2x32xf32>
    %209 = arith.mulf %204, %206 : vector<2x32xf32>
    %210 = arith.addf %208, %209 : vector<2x32xf32>
    %211 = math.tanh %210 : vector<2x32xf32>
    %212 = arith.mulf %207, %211 : vector<2x32xf32>
    %213 = vector.extract_strided_slice %7 {offsets = [0, 7], sizes = [2, 1], strides = [1, 1]} : vector<2x8xf32> to vector<2x1xf32>
    %214 = vector.broadcast %213 : vector<2x1xf32> to vector<2x32xf32>
    %215 = arith.mulf %214, %212 : vector<2x32xf32>
    %216 = arith.addf %190, %215 : vector<2x32xf32>
    %217 = vector.extract_strided_slice %8 {offsets = [0, 7], sizes = [2, 1], strides = [1, 1]} : vector<2x8xf32> to vector<2x1xf32>
    %218 = vector.broadcast %217 : vector<2x1xf32> to vector<2x32xf32>
    %219 = arith.mulf %218, %212 : vector<2x32xf32>
    %220 = arith.addf %194, %219 : vector<2x32xf32>
    %c0_31 = arith.constant 0 : index
    %c0_32 = arith.constant 0 : index
    %221 = vector.load %arg6[%c0_31, %c0_32] : memref<32x128xf32, #tpu.memory_space<vmem>>, vector<32x128xf32>
    %cst_33 = arith.constant dense<0.000000e+00> : vector<2x128xf32>
    %222 = tpu.matmul %216, %221, %cst_33 {dimension_numbers = #tpu.dot_dimension_numbers<[1], [0], [0], [1], [0, 0, 1, 1], [], []>} : vector<2x32xf32>, vector<32x128xf32>, vector<2x128xf32> -> vector<2x128xf32>
    %c0_34 = arith.constant 0 : index
    %c0_35 = arith.constant 0 : index
    %223 = vector.load %arg7[%c0_34, %c0_35] : memref<32x128xf32, #tpu.memory_space<vmem>>, vector<32x128xf32>
    %cst_36 = arith.constant dense<0.000000e+00> : vector<2x128xf32>
    %224 = tpu.matmul %220, %223, %cst_36 {dimension_numbers = #tpu.dot_dimension_numbers<[1], [0], [0], [1], [0, 0, 1, 1], [], []>} : vector<2x32xf32>, vector<32x128xf32>, vector<2x128xf32> -> vector<2x128xf32>
    %225 = arith.addf %222, %224 : vector<2x128xf32>
    %c0_37 = arith.constant 0 : index
    %c0_38 = arith.constant 0 : index
    %226 = vector.load %arg8[%c0_37, %c0_38] : memref<1x128xf32, #tpu.memory_space<vmem>>, vector<1x128xf32>
    %227 = vector.broadcast %226 : vector<1x128xf32> to vector<2x128xf32>
    %228 = arith.addf %225, %227 : vector<2x128xf32>
    %c0_39 = arith.constant 0 : index
    %c0_40 = arith.constant 0 : index
    %229 = vector.load %arg9[%c0_39, %c0_40] : memref<2x128xf32, #tpu.memory_space<vmem>>, vector<2x128xf32>
    tpu.vector_store %arg9[%c0_39, %c0_40], %228 {strides = array<i32>} : memref<2x128xf32, #tpu.memory_space<vmem>>, vector<2x128xf32>,
    return
  }
}

</mosaic_0001>

<llo_original>
// kernel: lstm_fet_forward.1
$region0: #{lstm_fet_forward.1}
  #allocation0 [shape = 'u32[]', space=smem, size = 0x4, offset = 0x4, fixed_abs, tag = 'smem constant byte address 0x4 - core index']
  #allocation1 [shape = 'u32[72,128]{1,0:T(1,128)}', space=vmem, size = 0x9000, scoped, tag = 'internal scratch']
  %s0 = inlined_call_operand.vmem [shape: f32[16,32], index: 0, kind: input, shape index: {}]
  %s1 = inlined_call_operand.vmem [shape: f32[2,8], index: 1, kind: input, shape index: {}]
  %s2 = inlined_call_operand.vmem [shape: f32[2,8], index: 2, kind: input, shape index: {}]
  %s3 = inlined_call_operand.vmem [shape: f32[32,128], index: 3, kind: input, shape index: {}]
  %s4 = inlined_call_operand.vmem [shape: f32[32,128], index: 4, kind: input, shape index: {}]
  %s5 = inlined_call_operand.vmem [shape: f32[1,128], index: 5, kind: input, shape index: {}]
  %s6 = inlined_call_operand.vmem [shape: f32[32,128], index: 6, kind: input, shape index: {}]
  %s7 = inlined_call_operand.vmem [shape: f32[32,128], index: 7, kind: input, shape index: {}]
  %s8 = inlined_call_operand.vmem [shape: f32[1,128], index: 8, kind: input, shape index: {}]
  %s9 = inlined_call_operand.vmem [shape: f32[2,128], index: 9, kind: output, shape index: {}]
  %s10 = sld [smem:[#allocation0]]
  $region46: #{lstm_fet_forward.1} parent=0
    _
  %s12 = ssub.s32 1, %s10
  %s13 = scalar_select 0, %s12, %s10
  // Predicated region
  $region2: #{lstm_fet_forward.1} parent=0 // pred_check
    _
  $region3: #{lstm_fet_forward.1} parent=0 // pred_check_branch
    %15 = sbr.rel (0) target = $region5
  $region4: #{lstm_fet_forward.1} parent=0 // pred_region
    _
  $region5: #{lstm_fet_forward.1} parent=0 // pred_fallthru
    _
  // Predicated region
  $region6: #{lstm_fet_forward.1} parent=0 // pred_check
    _
  $region7: #{lstm_fet_forward.1} parent=0 // pred_check_branch
    %17 = sbr.rel (0) target = $region9
  $region8: #{lstm_fet_forward.1} parent=0 // pred_region
    _
  $region9: #{lstm_fet_forward.1} parent=0 // pred_fallthru
    _
  // Predicated region
  $region10: #{lstm_fet_forward.1} parent=0 // pred_check
    _
  $region11: #{lstm_fet_forward.1} parent=0 // pred_check_branch
    %19 = sbr.rel (0) target = $region13
  $region12: #{lstm_fet_forward.1} parent=0 // pred_region
    _
  $region13: #{lstm_fet_forward.1} parent=0 // pred_fallthru
    _
  // Predicated region
  $region14: #{lstm_fet_forward.1} parent=0 // pred_check
    _
  $region15: #{lstm_fet_forward.1} parent=0 // pred_check_branch
    %21 = sbr.rel (0) target = $region17
  $region16: #{lstm_fet_forward.1} parent=0 // pred_region
    _
  $region17: #{lstm_fet_forward.1} parent=0 // pred_fallthru
    _
  // Predicated region
  $region18: #{lstm_fet_forward.1} parent=0 // pred_check
    _
  $region19: #{lstm_fet_forward.1} parent=0 // pred_check_branch
    %23 = sbr.rel (0) target = $region21
  $region20: #{lstm_fet_forward.1} parent=0 // pred_region
    _
  $region21: #{lstm_fet_forward.1} parent=0 // pred_fallthru
    _
  // Predicated region
  $region22: #{lstm_fet_forward.1} parent=0 // pred_check
    _
  $region23: #{lstm_fet_forward.1} parent=0 // pred_check_branch
    %25 = sbr.rel (0) target = $region25
  $region24: #{lstm_fet_forward.1} parent=0 // pred_region
    _
  $region25: #{lstm_fet_forward.1} parent=0 // pred_fallthru
    _
  // Predicated region
  $region26: #{lstm_fet_forward.1} parent=0 // pred_check
    _
  $region27: #{lstm_fet_forward.1} parent=0 // pred_check_branch
    %27 = sbr.rel (0) target = $region29
  $region28: #{lstm_fet_forward.1} parent=0 // pred_region
    _
  $region29: #{lstm_fet_forward.1} parent=0 // pred_fallthru
    _
  // Predicated region
  $region30: #{lstm_fet_forward.1} parent=0 // pred_check
    _
  $region31: #{lstm_fet_forward.1} parent=0 // pred_check_branch
    %29 = sbr.rel (0) target = $region33
  $region32: #{lstm_fet_forward.1} parent=0 // pred_region
    _
  $region33: #{lstm_fet_forward.1} parent=0 // pred_fallthru
    _
  // Predicated region
  $region34: #{lstm_fet_forward.1} parent=0 // pred_check
    _
  $region35: #{lstm_fet_forward.1} parent=0 // pred_check_branch
    %31 = sbr.rel (0) target = $region37
  $region36: #{lstm_fet_forward.1} parent=0 // pred_region
    _
  $region37: #{lstm_fet_forward.1} parent=0 // pred_fallthru
    _
  %v32 = vld [vmem:[%s0] sm:$0xff]
  %v33 = vld [vmem:[%s0 + $0x8] sm:$0xff]
  %v34 = vld [vmem:[%s3] sm:$0xff]
  %v35 = vld [vmem:[%s3 + $0x8] sm:$0xff]
  %v36 = vld [vmem:[%s3 + $0x10] sm:$0xff]
  %v37 = vld [vmem:[%s3 + $0x18] sm:$0xff]
  %v38 = vld [vmem:[%s5] sm:$0x1]
  %v40 = vperm.slane %v38, 0
  %vm42 = vcmask 261120
  %v44 = vsel %vm42, %v32, 0
  %v47 = vsel %vm42, %v33, 0
  %49 = vmatpush.msra.mxu0 0.0
  %50 = vmatpush.msra.mxu0 0.0
  %51 = vmatpush.msra.mxu0 0.0
  %52 = vmatpush.msra.mxu0 0.0
  %53 = vmatpush.msra.mxu0 0.0
  %54 = vmatpush.msra.mxu0 0.0
  %55 = vmatpush.msra.mxu0 0.0
  %56 = vmatpush.msra.mxu0 0.0
  %57 = vmatpush.msra.mxu0 0.0
  %58 = vmatpush.msra.mxu0 0.0
  %59 = vmatpush.msra.mxu0 0.0
  %60 = vmatpush.msra.mxu0 0.0
  %61 = vmatpush.msra.mxu0 %v37
  %62 = vmatpush.msra.mxu0 %v36
  %63 = vmatpush.msra.mxu0 %v35
  %64 = vmatpush.msra.mxu0 %v34
  %65 = vmatmul.f32.gmra.mxu0 %v44
  %v66 = vpop.f32.mrf.mxu0
  %v67 = vadd.f32 %v40, %v66
  %68 = vmatmul.f32.gmra.mxu0 %v47
  %v69 = vpop.f32.mrf.mxu0
  %v70 = vadd.f32 %v40, %v69
  %71 = vdwg.mxu0
  %v72 = vld [vmem:[%s4] sm:$0xff]
  %v73 = vld [vmem:[%s4 + $0x8] sm:$0xff]
  %v74 = vld [vmem:[%s4 + $0x10] sm:$0xff]
  %v75 = vld [vmem:[%s4 + $0x18] sm:$0xff]
  %v76 = vld [vmem:[%s1] sm:$0x3]
  %v77 = vld [vmem:[%s2] sm:$0x3]
  %v79 = vsel %vm42, 0.0, 0
  %81 = vmatpush.msra.mxu0 0.0
  %82 = vmatpush.msra.mxu0 0.0
  %83 = vmatpush.msra.mxu0 0.0
  %84 = vmatpush.msra.mxu0 0.0
  %85 = vmatpush.msra.mxu0 0.0
  %86 = vmatpush.msra.mxu0 0.0
  %87 = vmatpush.msra.mxu0 0.0
  %88 = vmatpush.msra.mxu0 0.0
  %89 = vmatpush.msra.mxu0 0.0
  %90 = vmatpush.msra.mxu0 0.0
  %91 = vmatpush.msra.mxu0 0.0
  %92 = vmatpush.msra.mxu0 0.0
  %93 = vmatpush.msra.mxu0 %v75
  %94 = vmatpush.msra.mxu0 %v74
  %95 = vmatpush.msra.mxu0 %v73
  %96 = vmatpush.msra.mxu0 %v72
  %97 = vmatmul.f32.gmra.mxu0 %v79
  %v98 = vpop.f32.mrf.mxu0
  %v99 = vadd.f32 0.0, %v98
  %100 = vdwg.mxu0
  %v101 = vadd.f32 %v67, %v99
  %v102 = vxor.u32 %v101, 2147483648
  %v103 = vmul.f32 %v102, 1.442695
  %v104 = vpow.pop %v103
  %v105 = vadd.f32 %v104, 1.0
  %v106 = vrcp.pop %v105
  %v107 = vmul.f32 %v105, %v106
  %v108 = vsub.f32 1.0, %v107
  %v109 = vmul.f32 %v106, %v108
  %v110 = vadd.f32 %v106, %v109
  %vm111 = vweird.f32 %v105
  %vm112 = vweird.f32 %v106
  %vm113 = vmor %vm111, %vm112
  %v114 = vsel %vm113, %v106, %v110
  %v115 = vand.u32 2147483647, %v105
  %vm116 = vcmp.eq.f32.partialorder %v115, 8.507059e+37
  %v117 = vand.u32 %v105, 2147483648
  %v118 = vor.u32 1.1754944e-38, %v117
  %v119 = vsel %vm116, %v118, %v114
  %v120 = vmul.f32 1.0, %v119
  %v121 = vtanh.pop %v101
  %v122 = vmul.f32 %v120, 0.0
  %124 = vrot.lane.b32.xlu0 %v121, 64
  %v125 = vpop.permute.xlu0 %124
  %v127 = vmul.f32 %v120, %v125
  %129 = vrot.lane.b32.xlu0 %v127, 32
  %v130 = vpop.permute.xlu0 %129
  %v132 = vadd.f32 %v122, %v130
  %v133 = vtanh.pop %v132
  %135 = vrot.lane.b32.xlu0 %v133, 64
  %v136 = vpop.permute.xlu0 %135
  %v138 = vmul.f32 %v120, %v136
  %140 = vset.pattern.permute.xlu0 0
  %141 = vperm.xlu0 %140, %v76
  %v142 = vpop.permute.xlu0 %141
  %v144 = vmul.f32 %v142, %v138
  %v145 = vadd.f32 %v144, 0.0
  %147 = vset.pattern.permute.xlu0 0
  %148 = vperm.xlu0 %147, %v77
  %v149 = vpop.permute.xlu0 %148
  %v151 = vmul.f32 %v149, %v138
  %v152 = vadd.f32 %v151, 0.0
  %154 = vrot.lane.b32.xlu0 %v138, 32
  %v155 = vpop.permute.xlu0 %154
  %v156 = vsel %vm42, %v155, 0
  %158 = vmatpush.msra.mxu0 0.0
  %159 = vmatpush.msra.mxu0 0.0
  %160 = vmatpush.msra.mxu0 0.0
  %161 = vmatpush.msra.mxu0 0.0
  %162 = vmatpush.msra.mxu0 0.0
  %163 = vmatpush.msra.mxu0 0.0
  %164 = vmatpush.msra.mxu0 0.0
  %165 = vmatpush.msra.mxu0 0.0
  %166 = vmatpush.msra.mxu0 0.0
  %167 = vmatpush.msra.mxu0 0.0
  %168 = vmatpush.msra.mxu0 0.0
  %169 = vmatpush.msra.mxu0 0.0
  %170 = vmatpush.msra.mxu0 %v75
  %171 = vmatpush.msra.mxu0 %v74
  %172 = vmatpush.msra.mxu0 %v73
  %173 = vmatpush.msra.mxu0 %v72
  %174 = vmatmul.f32.gmra.mxu0 %v156
  %v175 = vpop.f32.mrf.mxu0
  %v176 = vadd.f32 0.0, %v175
  %177 = vdwg.mxu0
  %v179 = vrot.slane %v176, 6
  %v181 = vadd.f32 %v67, %v179
  %v182 = vxor.u32 %v181, 2147483648
  %v183 = vmul.f32 %v182, 1.442695
  %v184 = vpow.pop %v183
  %v185 = vadd.f32 %v184, 1.0
  %v186 = vrcp.pop %v185
  %v187 = vmul.f32 %v185, %v186
  %v188 = vsub.f32 1.0, %v187
  %v189 = vmul.f32 %v186, %v188
  %v190 = vadd.f32 %v186, %v189
  %vm191 = vweird.f32 %v185
  %vm192 = vweird.f32 %v186
  %vm193 = vmor %vm191, %vm192
  %v194 = vsel %vm193, %v186, %v190
  %v195 = vand.u32 2147483647, %v185
  %vm196 = vcmp.eq.f32.partialorder %v195, 8.507059e+37
  %v197 = vand.u32 %v185, 2147483648
  %v198 = vor.u32 1.1754944e-38, %v197
  %v199 = vsel %vm196, %v198, %v194
  %v200 = vmul.f32 1.0, %v199
  %v201 = vtanh.pop %v181
  %v203 = vrot.slane %v132, 6
  %v205 = vmul.f32 %v200, %v203
  %207 = vrot.lane.b32.xlu0 %v201, 64
  %v208 = vpop.permute.xlu0 %207
  %v210 = vmul.f32 %v200, %v208
  %212 = vrot.lane.b32.xlu0 %v210, 32
  %v213 = vpop.permute.xlu0 %212
  %v215 = vadd.f32 %v205, %v213
  %v216 = vtanh.pop %v215
  %218 = vrot.lane.b32.xlu0 %v216, 64
  %v219 = vpop.permute.xlu0 %218
  %v221 = vmul.f32 %v200, %v219
  %222 = vset.pattern.permute.xlu0 1
  %223 = vperm.xlu0 %222, %v76
  %v224 = vpop.permute.xlu0 %223
  %v227 = vrot.slane %v221, 2
  %228 = vrot.lane.b32.xlu0 %v227, 32
  %v229 = vpop.permute.xlu0 %228
  %v231 = vmul.f32 %v224, %v229
  %233 = vrot.lane.b32.xlu0 %v231, 96
  %v234 = vpop.permute.xlu0 %233
  %v236 = vadd.f32 %v145, %v234
  %237 = vset.pattern.permute.xlu0 1
  %238 = vperm.xlu0 %237, %v77
  %v239 = vpop.permute.xlu0 %238
  %v241 = vmul.f32 %v239, %v229
  %243 = vrot.lane.b32.xlu0 %v241, 96
  %v244 = vpop.permute.xlu0 %243
  %v246 = vadd.f32 %v152, %v244
  %v247 = vsel %vm42, %v229, 0
  %249 = vmatpush.msra.mxu0 0.0
  %250 = vmatpush.msra.mxu0 0.0
  %251 = vmatpush.msra.mxu0 0.0
  %252 = vmatpush.msra.mxu0 0.0
  %253 = vmatpush.msra.mxu0 0.0
  %254 = vmatpush.msra.mxu0 0.0
  %255 = vmatpush.msra.mxu0 0.0
  %256 = vmatpush.msra.mxu0 0.0
  %257 = vmatpush.msra.mxu0 0.0
  %258 = vmatpush.msra.mxu0 0.0
  %259 = vmatpush.msra.mxu0 0.0
  %260 = vmatpush.msra.mxu0 0.0
  %261 = vmatpush.msra.mxu0 %v75
  %262 = vmatpush.msra.mxu0 %v74
  %263 = vmatpush.msra.mxu0 %v73
  %264 = vmatpush.msra.mxu0 %v72
  %265 = vmatmul.f32.gmra.mxu0 %v247
  %v266 = vpop.f32.mrf.mxu0
  %v267 = vadd.f32 0.0, %v266
  %268 = vdwg.mxu0
  %v270 = vrot.slane %v267, 4
  %v272 = vadd.f32 %v67, %v270
  %v273 = vxor.u32 %v272, 2147483648
  %v274 = vmul.f32 %v273, 1.442695
  %v275 = vpow.pop %v274
  %v276 = vadd.f32 %v275, 1.0
  %v277 = vrcp.pop %v276
  %v278 = vmul.f32 %v276, %v277
  %v279 = vsub.f32 1.0, %v278
  %v280 = vmul.f32 %v277, %v279
  %v281 = vadd.f32 %v277, %v280
  %vm282 = vweird.f32 %v276
  %vm283 = vweird.f32 %v277
  %vm284 = vmor %vm282, %vm283
  %v285 = vsel %vm284, %v277, %v281
  %v286 = vand.u32 2147483647, %v276
  %vm287 = vcmp.eq.f32.partialorder %v286, 8.507059e+37
  %v288 = vand.u32 %v276, 2147483648
  %v289 = vor.u32 1.1754944e-38, %v288
  %v290 = vsel %vm287, %v289, %v285
  %v291 = vmul.f32 1.0, %v290
  %v292 = vtanh.pop %v272
  %v294 = vrot.slane %v215, 6
  %v296 = vmul.f32 %v291, %v294
  %298 = vrot.lane.b32.xlu0 %v292, 64
  %v299 = vpop.permute.xlu0 %298
  %v301 = vmul.f32 %v291, %v299
  %303 = vrot.lane.b32.xlu0 %v301, 32
  %v304 = vpop.permute.xlu0 %303
  %v306 = vadd.f32 %v296, %v304
  %v307 = vtanh.pop %v306
  %309 = vrot.lane.b32.xlu0 %v307, 64
  %v310 = vpop.permute.xlu0 %309
  %v312 = vmul.f32 %v291, %v310
  %313 = vset.pattern.permute.xlu0 2
  %314 = vperm.xlu0 %313, %v76
  %v315 = vpop.permute.xlu0 %314
  %v318 = vrot.slane %v312, 4
  %319 = vrot.lane.b32.xlu0 %v318, 32
  %v320 = vpop.permute.xlu0 %319
  %v322 = vmul.f32 %v315, %v320
  %324 = vrot.lane.b32.xlu0 %v322, 96
  %v325 = vpop.permute.xlu0 %324
  %v327 = vadd.f32 %v236, %v325
  %328 = vset.pattern.permute.xlu0 2
  %329 = vperm.xlu0 %328, %v77
  %v330 = vpop.permute.xlu0 %329
  %v332 = vmul.f32 %v330, %v320
  %334 = vrot.lane.b32.xlu0 %v332, 96
  %v335 = vpop.permute.xlu0 %334
  %v337 = vadd.f32 %v246, %v335
  %v338 = vsel %vm42, %v320, 0
  %340 = vmatpush.msra.mxu0 0.0
  %341 = vmatpush.msra.mxu0 0.0
  %342 = vmatpush.msra.mxu0 0.0
  %343 = vmatpush.msra.mxu0 0.0
  %344 = vmatpush.msra.mxu0 0.0
  %345 = vmatpush.msra.mxu0 0.0
  %346 = vmatpush.msra.mxu0 0.0
  %347 = vmatpush.msra.mxu0 0.0
  %348 = vmatpush.msra.mxu0 0.0
  %349 = vmatpush.msra.mxu0 0.0
  %350 = vmatpush.msra.mxu0 0.0
  %351 = vmatpush.msra.mxu0 0.0
  %352 = vmatpush.msra.mxu0 %v75
  %353 = vmatpush.msra.mxu0 %v74
  %354 = vmatpush.msra.mxu0 %v73
  %355 = vmatpush.msra.mxu0 %v72
  %356 = vmatmul.f32.gmra.mxu0 %v338
  %v357 = vpop.f32.mrf.mxu0
  %v358 = vadd.f32 0.0, %v357
  %359 = vdwg.mxu0
  %v361 = vrot.slane %v358, 2
  %v363 = vadd.f32 %v67, %v361
  %v364 = vxor.u32 %v363, 2147483648
  %v365 = vmul.f32 %v364, 1.442695
  %v366 = vpow.pop %v365
  %v367 = vadd.f32 %v366, 1.0
  %v368 = vrcp.pop %v367
  %v369 = vmul.f32 %v367, %v368
  %v370 = vsub.f32 1.0, %v369
  %v371 = vmul.f32 %v368, %v370
  %v372 = vadd.f32 %v368, %v371
  %vm373 = vweird.f32 %v367
  %vm374 = vweird.f32 %v368
  %vm375 = vmor %vm373, %vm374
  %v376 = vsel %vm375, %v368, %v372
  %v377 = vand.u32 2147483647, %v367
  %vm378 = vcmp.eq.f32.partialorder %v377, 8.507059e+37
  %v379 = vand.u32 %v367, 2147483648
  %v380 = vor.u32 1.1754944e-38, %v379
  %v381 = vsel %vm378, %v380, %v376
  %v382 = vmul.f32 1.0, %v381
  %v383 = vtanh.pop %v363
  %v385 = vrot.slane %v306, 6
  %v387 = vmul.f32 %v382, %v385
  %389 = vrot.lane.b32.xlu0 %v383, 64
  %v390 = vpop.permute.xlu0 %389
  %v392 = vmul.f32 %v382, %v390
  %394 = vrot.lane.b32.xlu0 %v392, 32
  %v395 = vpop.permute.xlu0 %394
  %v397 = vadd.f32 %v387, %v395
  %v398 = vtanh.pop %v397
  %400 = vrot.lane.b32.xlu0 %v398, 64
  %v401 = vpop.permute.xlu0 %400
  %v403 = vmul.f32 %v382, %v401
  %404 = vset.pattern.permute.xlu0 3
  %405 = vperm.xlu0 %404, %v76
  %v406 = vpop.permute.xlu0 %405
  %v409 = vrot.slane %v403, 6
  %410 = vrot.lane.b32.xlu0 %v409, 32
  %v411 = vpop.permute.xlu0 %410
  %v413 = vmul.f32 %v406, %v411
  %415 = vrot.lane.b32.xlu0 %v413, 96
  %v416 = vpop.permute.xlu0 %415
  %v418 = vadd.f32 %v327, %v416
  %419 = vset.pattern.permute.xlu0 3
  %420 = vperm.xlu0 %419, %v77
  %v421 = vpop.permute.xlu0 %420
  %v423 = vmul.f32 %v421, %v411
  %425 = vrot.lane.b32.xlu0 %v423, 96
  %v426 = vpop.permute.xlu0 %425
  %v428 = vadd.f32 %v337, %v426
  %v429 = vsel %vm42, %v411, 0
  %431 = vmatpush.msra.mxu0 0.0
  %432 = vmatpush.msra.mxu0 0.0
  %433 = vmatpush.msra.mxu0 0.0
  %434 = vmatpush.msra.mxu0 0.0
  %435 = vmatpush.msra.mxu0 0.0
  %436 = vmatpush.msra.mxu0 0.0
  %437 = vmatpush.msra.mxu0 0.0
  %438 = vmatpush.msra.mxu0 0.0
  %439 = vmatpush.msra.mxu0 0.0
  %440 = vmatpush.msra.mxu0 0.0
  %441 = vmatpush.msra.mxu0 0.0
  %442 = vmatpush.msra.mxu0 0.0
  %443 = vmatpush.msra.mxu0 %v75
  %444 = vmatpush.msra.mxu0 %v74
  %445 = vmatpush.msra.mxu0 %v73
  %446 = vmatpush.msra.mxu0 %v72
  %447 = vmatmul.f32.gmra.mxu0 %v429
  %v448 = vpop.f32.mrf.mxu0
  %v449 = vadd.f32 0.0, %v448
  %450 = vdwg.mxu0
  %v451 = vadd.f32 %v70, %v449
  %v452 = vxor.u32 %v451, 2147483648
  %v453 = vmul.f32 %v452, 1.442695
  %v454 = vpow.pop %v453
  %v455 = vadd.f32 %v454, 1.0
  %v456 = vrcp.pop %v455
  %v457 = vmul.f32 %v455, %v456
  %v458 = vsub.f32 1.0, %v457
  %v459 = vmul.f32 %v456, %v458
  %v460 = vadd.f32 %v456, %v459
  %vm461 = vweird.f32 %v455
  %vm462 = vweird.f32 %v456
  %vm463 = vmor %vm461, %vm462
  %v464 = vsel %vm463, %v456, %v460
  %v465 = vand.u32 2147483647, %v455
  %vm466 = vcmp.eq.f32.partialorder %v465, 8.507059e+37
  %v467 = vand.u32 %v455, 2147483648
  %v468 = vor.u32 1.1754944e-38, %v467
  %v469 = vsel %vm466, %v468, %v464
  %v470 = vmul.f32 1.0, %v469
  %v471 = vtanh.pop %v451
  %v473 = vrot.slane %v397, 6
  %v475 = vmul.f32 %v470, %v473
  %477 = vrot.lane.b32.xlu0 %v471, 64
  %v478 = vpop.permute.xlu0 %477
  %v480 = vmul.f32 %v470, %v478
  %482 = vrot.lane.b32.xlu0 %v480, 32
  %v483 = vpop.permute.xlu0 %482
  %v485 = vadd.f32 %v475, %v483
  %v486 = vtanh.pop %v485
  %488 = vrot.lane.b32.xlu0 %v486, 64
  %v489 = vpop.permute.xlu0 %488
  %v491 = vmul.f32 %v470, %v489
  %492 = vset.pattern.permute.xlu0 4
  %493 = vperm.xlu0 %492, %v76
  %v494 = vpop.permute.xlu0 %493
  %v496 = vmul.f32 %v494, %v491
  %v497 = vadd.f32 %v418, %v496
  %498 = vset.pattern.permute.xlu0 4
  %499 = vperm.xlu0 %498, %v77
  %v500 = vpop.permute.xlu0 %499
  %v502 = vmul.f32 %v500, %v491
  %v503 = vadd.f32 %v428, %v502
  %505 = vrot.lane.b32.xlu0 %v491, 32
  %v506 = vpop.permute.xlu0 %505
  %v507 = vsel %vm42, %v506, 0
  %509 = vmatpush.msra.mxu0 0.0
  %510 = vmatpush.msra.mxu0 0.0
  %511 = vmatpush.msra.mxu0 0.0
  %512 = vmatpush.msra.mxu0 0.0
  %513 = vmatpush.msra.mxu0 0.0
  %514 = vmatpush.msra.mxu0 0.0
  %515 = vmatpush.msra.mxu0 0.0
  %516 = vmatpush.msra.mxu0 0.0
  %517 = vmatpush.msra.mxu0 0.0
  %518 = vmatpush.msra.mxu0 0.0
  %519 = vmatpush.msra.mxu0 0.0
  %520 = vmatpush.msra.mxu0 0.0
  %521 = vmatpush.msra.mxu0 %v75
  %522 = vmatpush.msra.mxu0 %v74
  %523 = vmatpush.msra.mxu0 %v73
  %524 = vmatpush.msra.mxu0 %v72
  %525 = vmatmul.f32.gmra.mxu0 %v507
  %v526 = vpop.f32.mrf.mxu0
  %v527 = vadd.f32 0.0, %v526
  %528 = vdwg.mxu0
  %v530 = vrot.slane %v527, 6
  %v532 = vadd.f32 %v70, %v530
  %v533 = vxor.u32 %v532, 2147483648
  %v534 = vmul.f32 %v533, 1.442695
  %v535 = vpow.pop %v534
  %v536 = vadd.f32 %v535, 1.0
  %v537 = vrcp.pop %v536
  %v538 = vmul.f32 %v536, %v537
  %v539 = vsub.f32 1.0, %v538
  %v540 = vmul.f32 %v537, %v539
  %v541 = vadd.f32 %v537, %v540
  %vm542 = vweird.f32 %v536
  %vm543 = vweird.f32 %v537
  %vm544 = vmor %vm542, %vm543
  %v545 = vsel %vm544, %v537, %v541
  %v546 = vand.u32 2147483647, %v536
  %vm547 = vcmp.eq.f32.partialorder %v546, 8.507059e+37
  %v548 = vand.u32 %v536, 2147483648
  %v549 = vor.u32 1.1754944e-38, %v548
  %v550 = vsel %vm547, %v549, %v545
  %v551 = vmul.f32 1.0, %v550
  %v552 = vtanh.pop %v532
  %v554 = vrot.slane %v485, 6
  %v556 = vmul.f32 %v551, %v554
  %558 = vrot.lane.b32.xlu0 %v552, 64
  %v559 = vpop.permute.xlu0 %558
  %v561 = vmul.f32 %v551, %v559
  %563 = vrot.lane.b32.xlu0 %v561, 32
  %v564 = vpop.permute.xlu0 %563
  %v566 = vadd.f32 %v556, %v564
  %v567 = vtanh.pop %v566
  %569 = vrot.lane.b32.xlu0 %v567, 64
  %v570 = vpop.permute.xlu0 %569
  %v572 = vmul.f32 %v551, %v570
  %573 = vset.pattern.permute.xlu0 5
  %574 = vperm.xlu0 %573, %v76
  %v575 = vpop.permute.xlu0 %574
  %v578 = vrot.slane %v572, 2
  %579 = vrot.lane.b32.xlu0 %v578, 32
  %v580 = vpop.permute.xlu0 %579
  %v582 = vmul.f32 %v575, %v580
  %584 = vrot.lane.b32.xlu0 %v582, 96
  %v585 = vpop.permute.xlu0 %584
  %v587 = vadd.f32 %v497, %v585
  %588 = vset.pattern.permute.xlu0 5
  %589 = vperm.xlu0 %588, %v77
  %v590 = vpop.permute.xlu0 %589
  %v592 = vmul.f32 %v590, %v580
  %594 = vrot.lane.b32.xlu0 %v592, 96
  %v595 = vpop.permute.xlu0 %594
  %v597 = vadd.f32 %v503, %v595
  %v598 = vsel %vm42, %v580, 0
  %600 = vmatpush.msra.mxu0 0.0
  %601 = vmatpush.msra.mxu0 0.0
  %602 = vmatpush.msra.mxu0 0.0
  %603 = vmatpush.msra.mxu0 0.0
  %604 = vmatpush.msra.mxu0 0.0
  %605 = vmatpush.msra.mxu0 0.0
  %606 = vmatpush.msra.mxu0 0.0
  %607 = vmatpush.msra.mxu0 0.0
  %608 = vmatpush.msra.mxu0 0.0
  %609 = vmatpush.msra.mxu0 0.0
  %610 = vmatpush.msra.mxu0 0.0
  %611 = vmatpush.msra.mxu0 0.0
  %612 = vmatpush.msra.mxu0 %v75
  %613 = vmatpush.msra.mxu0 %v74
  %614 = vmatpush.msra.mxu0 %v73
  %615 = vmatpush.msra.mxu0 %v72
  %616 = vmatmul.f32.gmra.mxu0 %v598
  %v617 = vpop.f32.mrf.mxu0
  %v618 = vadd.f32 0.0, %v617
  %619 = vdwg.mxu0
  %v621 = vrot.slane %v618, 4
  %v623 = vadd.f32 %v70, %v621
  %v624 = vxor.u32 %v623, 2147483648
  %v625 = vmul.f32 %v624, 1.442695
  %v626 = vpow.pop %v625
  %v627 = vadd.f32 %v626, 1.0
  %v628 = vrcp.pop %v627
  %v629 = vmul.f32 %v627, %v628
  %v630 = vsub.f32 1.0, %v629
  %v631 = vmul.f32 %v628, %v630
  %v632 = vadd.f32 %v628, %v631
  %vm633 = vweird.f32 %v627
  %vm634 = vweird.f32 %v628
  %vm635 = vmor %vm633, %vm634
  %v636 = vsel %vm635, %v628, %v632
  %v637 = vand.u32 2147483647, %v627
  %vm638 = vcmp.eq.f32.partialorder %v637, 8.507059e+37
  %v639 = vand.u32 %v627, 2147483648
  %v640 = vor.u32 1.1754944e-38, %v639
  %v641 = vsel %vm638, %v640, %v636
  %v642 = vmul.f32 1.0, %v641
  %v643 = vtanh.pop %v623
  %v645 = vrot.slane %v566, 6
  %v647 = vmul.f32 %v642, %v645
  %649 = vrot.lane.b32.xlu0 %v643, 64
  %v650 = vpop.permute.xlu0 %649
  %v652 = vmul.f32 %v642, %v650
  %654 = vrot.lane.b32.xlu0 %v652, 32
  %v655 = vpop.permute.xlu0 %654
  %v657 = vadd.f32 %v647, %v655
  %v658 = vtanh.pop %v657
  %660 = vrot.lane.b32.xlu0 %v658, 64
  %v661 = vpop.permute.xlu0 %660
  %v663 = vmul.f32 %v642, %v661
  %664 = vset.pattern.permute.xlu0 6
  %665 = vperm.xlu0 %664, %v76
  %v666 = vpop.permute.xlu0 %665
  %v669 = vrot.slane %v663, 4
  %670 = vrot.lane.b32.xlu0 %v669, 32
  %v671 = vpop.permute.xlu0 %670
  %v673 = vmul.f32 %v666, %v671
  %675 = vrot.lane.b32.xlu0 %v673, 96
  %v676 = vpop.permute.xlu0 %675
  %v678 = vadd.f32 %v587, %v676
  %679 = vset.pattern.permute.xlu0 6
  %680 = vperm.xlu0 %679, %v77
  %v681 = vpop.permute.xlu0 %680
  %v683 = vmul.f32 %v681, %v671
  %685 = vrot.lane.b32.xlu0 %v683, 96
  %v686 = vpop.permute.xlu0 %685
  %v688 = vadd.f32 %v597, %v686
  %v689 = vsel %vm42, %v671, 0
  %691 = vmatpush.msra.mxu0 0.0
  %692 = vmatpush.msra.mxu0 0.0
  %693 = vmatpush.msra.mxu0 0.0
  %694 = vmatpush.msra.mxu0 0.0
  %695 = vmatpush.msra.mxu0 0.0
  %696 = vmatpush.msra.mxu0 0.0
  %697 = vmatpush.msra.mxu0 0.0
  %698 = vmatpush.msra.mxu0 0.0
  %699 = vmatpush.msra.mxu0 0.0
  %700 = vmatpush.msra.mxu0 0.0
  %701 = vmatpush.msra.mxu0 0.0
  %702 = vmatpush.msra.mxu0 0.0
  %703 = vmatpush.msra.mxu0 %v75
  %704 = vmatpush.msra.mxu0 %v74
  %705 = vmatpush.msra.mxu0 %v73
  %706 = vmatpush.msra.mxu0 %v72
  %707 = vmatmul.f32.gmra.mxu0 %v689
  %v708 = vpop.f32.mrf.mxu0
  %v709 = vadd.f32 0.0, %v708
  %710 = vdwg.mxu0
  %v712 = vrot.slane %v709, 2
  %v714 = vadd.f32 %v70, %v712
  %v715 = vxor.u32 %v714, 2147483648
  %v716 = vmul.f32 %v715, 1.442695
  %v717 = vpow.pop %v716
  %v718 = vadd.f32 %v717, 1.0
  %v719 = vrcp.pop %v718
  %v720 = vmul.f32 %v718, %v719
  %v721 = vsub.f32 1.0, %v720
  %v722 = vmul.f32 %v719, %v721
  %v723 = vadd.f32 %v719, %v722
  %vm724 = vweird.f32 %v718
  %vm725 = vweird.f32 %v719
  %vm726 = vmor %vm724, %vm725
  %v727 = vsel %vm726, %v719, %v723
  %v728 = vand.u32 2147483647, %v718
  %vm729 = vcmp.eq.f32.partialorder %v728, 8.507059e+37
  %v730 = vand.u32 %v718, 2147483648
  %v731 = vor.u32 1.1754944e-38, %v730
  %v732 = vsel %vm729, %v731, %v727
  %v733 = vmul.f32 1.0, %v732
  %v734 = vtanh.pop %v714
  %v736 = vrot.slane %v657, 6
  %v738 = vmul.f32 %v733, %v736
  %740 = vrot.lane.b32.xlu0 %v734, 64
  %v741 = vpop.permute.xlu0 %740
  %v743 = vmul.f32 %v733, %v741
  %745 = vrot.lane.b32.xlu0 %v743, 32
  %v746 = vpop.permute.xlu0 %745
  %v748 = vadd.f32 %v738, %v746
  %v749 = vtanh.pop %v748
  %751 = vrot.lane.b32.xlu0 %v749, 64
  %v752 = vpop.permute.xlu0 %751
  %v754 = vmul.f32 %v733, %v752
  %755 = vset.pattern.permute.xlu0 7
  %756 = vperm.xlu0 %755, %v76
  %v757 = vpop.permute.xlu0 %756
  %v760 = vrot.slane %v754, 6
  %761 = vrot.lane.b32.xlu0 %v760, 32
  %v762 = vpop.permute.xlu0 %761
  %v764 = vmul.f32 %v757, %v762
  %766 = vrot.lane.b32.xlu0 %v764, 96
  %v767 = vpop.permute.xlu0 %766
  %v769 = vadd.f32 %v678, %v767
  %770 = vset.pattern.permute.xlu0 7
  %771 = vperm.xlu0 %770, %v77
  %v772 = vpop.permute.xlu0 %771
  %v774 = vmul.f32 %v772, %v762
  %776 = vrot.lane.b32.xlu0 %v774, 96
  %v777 = vpop.permute.xlu0 %776
  %v779 = vadd.f32 %v688, %v777
  %v780 = vld [vmem:[%s6] sm:$0xff]
  %v781 = vld [vmem:[%s6 + $0x8] sm:$0xff]
  %v782 = vld [vmem:[%s6 + $0x10] sm:$0xff]
  %v783 = vld [vmem:[%s6 + $0x18] sm:$0xff]
  %v784 = vld [vmem:[%s7] sm:$0xff]
  %v785 = vld [vmem:[%s7 + $0x8] sm:$0xff]
  %v786 = vld [vmem:[%s7 + $0x10] sm:$0xff]
  %v787 = vld [vmem:[%s7 + $0x18] sm:$0xff]
  %789 = vrot.lane.b32.xlu0 %v779, 32
  %v790 = vpop.permute.xlu0 %789
  %v791 = vsel %vm42, %v790, 0
  %793 = vmatpush.msra.mxu0 0.0
  %794 = vmatpush.msra.mxu0 0.0
  %795 = vmatpush.msra.mxu0 0.0
  %796 = vmatpush.msra.mxu0 0.0
  %797 = vmatpush.msra.mxu0 0.0
  %798 = vmatpush.msra.mxu0 0.0
  %799 = vmatpush.msra.mxu0 0.0
  %800 = vmatpush.msra.mxu0 0.0
  %801 = vmatpush.msra.mxu0 0.0
  %802 = vmatpush.msra.mxu0 0.0
  %803 = vmatpush.msra.mxu0 0.0
  %804 = vmatpush.msra.mxu0 0.0
  %805 = vmatpush.msra.mxu0 %v787
  %806 = vmatpush.msra.mxu0 %v786
  %807 = vmatpush.msra.mxu0 %v785
  %808 = vmatpush.msra.mxu0 %v784
  %809 = vmatmul.f32.gmra.mxu0 %v791
  %v810 = vpop.f32.mrf.mxu0
  %v811 = vadd.f32 0.0, %v810
  %812 = vdwg.mxu0
  %814 = vrot.lane.b32.xlu0 %v769, 32
  %v815 = vpop.permute.xlu0 %814
  %v816 = vsel %vm42, %v815, 0
  %818 = vmatpush.msra.mxu0 0.0
  %819 = vmatpush.msra.mxu0 0.0
  %820 = vmatpush.msra.mxu0 0.0
  %821 = vmatpush.msra.mxu0 0.0
  %822 = vmatpush.msra.mxu0 0.0
  %823 = vmatpush.msra.mxu0 0.0
  %824 = vmatpush.msra.mxu0 0.0
  %825 = vmatpush.msra.mxu0 0.0
  %826 = vmatpush.msra.mxu0 0.0
  %827 = vmatpush.msra.mxu0 0.0
  %828 = vmatpush.msra.mxu0 0.0
  %829 = vmatpush.msra.mxu0 0.0
  %830 = vmatpush.msra.mxu0 %v783
  %831 = vmatpush.msra.mxu0 %v782
  %832 = vmatpush.msra.mxu0 %v781
  %833 = vmatpush.msra.mxu0 %v780
  %834 = vmatmul.f32.gmra.mxu0 %v816
  %v835 = vpop.f32.mrf.mxu0
  %v836 = vadd.f32 %v811, %v835
  %837 = vdwg.mxu0
  %v838 = vld [vmem:[%s8] sm:$0x1]
  %v840 = vperm.slane %v838, 0
  %v842 = vadd.f32 %v836, %v840
  %843 = vst [vmem:[%s9] sm:$0x3] %v842
  // Predicated region
  $region38: #{lstm_fet_forward.1} parent=0 // pred_check
    _
  $region39: #{lstm_fet_forward.1} parent=0 // pred_check_branch
    %845 = sbr.rel (0) target = $region41
  $region40: #{lstm_fet_forward.1} parent=0 // pred_region
    _
  $region41: #{lstm_fet_forward.1} parent=0 // pred_fallthru
    _
  // Predicated region
  $region42: #{lstm_fet_forward.1} parent=0 // pred_check
    _
  $region43: #{lstm_fet_forward.1} parent=0 // pred_check_branch
    %847 = sbr.rel (0) target = $region45
  $region44: #{lstm_fet_forward.1} parent=0 // pred_region
    _
  $region45: #{lstm_fet_forward.1} parent=0 // pred_fallthru
    _

</llo_original>
